<compile_context>
chip_gen: v5e
topology: v5e:2x2
jax: 0.10.0
libtpu: 0.0.40
codegen_flags: <defaults>
</compile_context>

<pallas_src>
import functools
import math

import jax
import jax.numpy as jnp
from jax.experimental import pallas as pl
from jax.experimental.pallas import tpu as pltpu

LANE = 128     # TPU lane width (hidden dims padded to this, once, off the hot path)
SUBLANE = 8    # f32 sublane tile (second-to-last dim granularity for the batch tile)


def _round_up(n, m):
    return ((n + m - 1) // m) * m


def _pad_axis(a, axis, multiple):
    size = a.shape[axis]
    pad = _round_up(size, multiple) - size
    if pad == 0:
        return a
    widths = [(0, 0)] * a.ndim
    widths[axis] = (0, pad)
    return jnp.pad(a, widths)


def mlp_kernel(x_ref, w1_ref, b1_ref, w2_ref, b2_ref, w3_ref, b3_ref, o_ref):
    """fc1 -> ReLU -> fc2 -> ReLU -> fc3 on one (TM, *) batch tile.

    Matmul operands are bf16 (x cast in-kernel); accumulation / bias / ReLU are f32.
    """
    x = x_ref[...].astype(jnp.bfloat16)
    h1 = jnp.dot(x, w1_ref[...], preferred_element_type=jnp.float32) + b1_ref[...]
    h1 = jnp.maximum(h1, 0.0).astype(jnp.bfloat16)
    h2 = jnp.dot(h1, w2_ref[...], preferred_element_type=jnp.float32) + b2_ref[...]
    h2 = jnp.maximum(h2, 0.0).astype(jnp.bfloat16)
    o_ref[...] = (jnp.dot(h2, w3_ref[...], preferred_element_type=jnp.float32)
                  + b3_ref[...]).astype(o_ref.dtype)


@functools.partial(jax.jit, static_argnames=("batch_tile",))
def complex_network_forward(x, prepared, *, batch_tile=1024):
    """x: [B, input_dims] float32.  prepared: output of prepare_params()."""
    w1, b1, w2, b2, w3, b3 = (prepared["w1"], prepared["b1"], prepared["w2"],
                              prepared["b2"], prepared["w3"], prepared["b3"])
    B, din = x.shape
    h1_p = w1.shape[1]
    h2_p = w2.shape[1]
    n_actions = w3.shape[1]

    # ---- batch tiling ------------------------------------------------------
    # Large tiles amortize the ~0.35us per-grid-step overhead.  When the whole
    # batch fits in one tile, still split into 2 steps so both v7x TensorCores
    # get work (no-op cost on single-TC v5e/v6e).
    if B >= 2 * batch_tile:
        tm = batch_tile
    elif B > SUBLANE:
        tm = min(batch_tile, _round_up((B + 1) // 2, SUBLANE))
    else:
        tm = SUBLANE

    b_pad = _round_up(B, tm)
    x_p = _pad_axis(x, 0, tm) if b_pad != B else x     # batch-row zero pad only
    grid = (b_pad // tm,)

    # activations / output walk the batch; weights & biases pinned at block (0,0)
    x_spec = pl.BlockSpec((tm, din), lambda i: (i, 0))
    o_spec = pl.BlockSpec((tm, n_actions), lambda i: (i, 0))

    def fixed(shape):
        return pl.BlockSpec(shape, lambda i: (0, 0))

    grid_spec = pltpu.PrefetchScalarGridSpec(
        num_scalar_prefetch=0,
        grid=grid,
        in_specs=[x_spec,
                  fixed((din, h1_p)), fixed((1, h1_p)),
                  fixed((h1_p, h2_p)), fixed((1, h2_p)),
                  fixed((h2_p, n_actions)), fixed((1, n_actions))],
        out_specs=o_spec,
    )

    out = pl.pallas_call(
        mlp_kernel,
        out_shape=jax.ShapeDtypeStruct((b_pad, n_actions), jnp.float32),
        grid_spec=grid_spec,
        compiler_params=pltpu.CompilerParams(
            dimension_semantics=("parallel",)),   # v7x: shard batch over both TCs
    )(x_p, w1, b1, w2, b2, w3, b3)

    return out if b_pad == B else out[:B]


def prepare_params(params):
    """One-time pre-processing (off the per-call path):
    pad hidden dims to 128 lanes (exact zero-pad) and cast weights to bf16.
    Weights stay [in, out] so the kernel computes x @ W + b (== torch x @ W.T + b).
    """
    w1, b1, w2, b2, w3, b3 = (params["w1"], params["b1"], params["w2"],
                              params["b2"], params["w3"], params["b3"])
    w1_p = _pad_axis(w1, 1, LANE).astype(jnp.bfloat16)                    # (din,  h1_p)
    b1_p = _pad_axis(b1, 1, LANE)                                         # (1,    h1_p) f32
    w2_p = _pad_axis(_pad_axis(w2, 0, LANE), 1, LANE).astype(jnp.bfloat16)  # (h1_p, h2_p)
    b2_p = _pad_axis(b2, 1, LANE)                                         # (1,    h2_p) f32
    w3_p = _pad_axis(w3, 0, LANE).astype(jnp.bfloat16)                    # (h2_p, n_actions)
    b3_p = b3                                                             # (1,    n_actions) f32
    return {"w1": w1_p, "b1": b1_p, "w2": w2_p, "b2": b2_p, "w3": w3_p, "b3": b3_p}


def init_params(key, input_dims, fc1_dims, fc2_dims, n_actions):
    """Deterministic init mimicking nn.Linear default: U(-1/sqrt(fan_in), 1/sqrt(fan_in))."""
    def linear(key, fan_in, fan_out):
        kw, kb = jax.random.split(key)
        bound = 1.0 / math.sqrt(fan_in)
        # stored as [in, out] (transposed vs. PyTorch's [out, in])
        w = jax.random.uniform(kw, (fan_in, fan_out), jnp.float32, -bound, bound)
        b = jax.random.uniform(kb, (1, fan_out), jnp.float32, -bound, bound)
        return w, b

    k1, k2, k3 = jax.random.split(key, 3)
    w1, b1 = linear(k1, input_dims, fc1_dims)
    w2, b2 = linear(k2, fc1_dims, fc2_dims)
    w3, b3 = linear(k3, fc2_dims, n_actions)
    return {"w1": w1, "b1": b1, "w2": w2, "b2": b2, "w3": w3, "b3": b3}


def reference_forward_f32(x, p):
    """Pure-f32 reference (matches the PyTorch module's numerics)."""
    h1 = jnp.maximum(x @ p["w1"] + p["b1"], 0.0)
    h2 = jnp.maximum(h1 @ p["w2"] + p["b2"], 0.0)
    return h2 @ p["w3"] + p["b3"]


def reference_forward_bf16(x, p):
    """Reference mirroring the kernel's bf16-operand / f32-accumulate numerics."""
    bf = jnp.bfloat16
    dot = lambda a, b: jnp.dot(a.astype(bf), b.astype(bf),
                               preferred_element_type=jnp.float32)
    h1 = jnp.maximum(dot(x, p["w1"]) + p["b1"], 0.0)
    h2 = jnp.maximum(dot(h1, p["w2"]) + p["b2"], 0.0)
    return dot(h2, p["w3"]) + p["b3"]


if __name__ == "__main__":
    # Small shapes consistent with the module: input_dims=(8,), fc1=32, fc2=32, n_actions=4
    batch, input_dims, fc1_dims, fc2_dims, n_actions = 8, 8, 32, 32, 4

    key = jax.random.PRNGKey(0)
    kx, kp, kx2 = jax.random.split(key, 3)
    x = jax.random.normal(kx, (batch, input_dims), dtype=jnp.float32)
    params = init_params(kp, input_dims, fc1_dims, fc2_dims, n_actions)
    prepared = prepare_params(params)   # one-time: pad hidden dims, cast to bf16

    out = jax.block_until_ready(complex_network_forward(x, prepared))
    assert out.shape == (batch, n_actions)
    # exact-numerics check (same bf16 operands, f32 accumulation)
    assert jnp.allclose(out, reference_forward_bf16(x, params), atol=1e-4, rtol=1e-4)
    # semantic check vs the f32 PyTorch-equivalent forward (bf16 rounding tolerance)
    assert jnp.allclose(out, reference_forward_f32(x, params), atol=5e-2, rtol=5e-2)

    # Exercise multi-step grid + batch padding: batch not a multiple of the tile.
    x2 = jax.random.normal(kx2, (300, input_dims), dtype=jnp.float32)
    out2 = jax.block_until_ready(complex_network_forward(x2, prepared, batch_tile=128))
    assert out2.shape == (300, n_actions)
    assert jnp.allclose(out2, reference_forward_bf16(x2, params), atol=1e-4, rtol=1e-4)

    # Default (large-tile) path on the same data: grid split in two for v7x megacore.
    out3 = jax.block_until_ready(complex_network_forward(x2, prepared))
    assert jnp.allclose(out3, out2, atol=1e-5, rtol=1e-5)

    print("KERNEL_OK")
</pallas_src>

<mosaic_0001>
module attributes {stable_mosaic.version = 11 : i64} {
  func.func @mlp_kernel(%arg0: i32, %arg1: memref<8x8xf32, #tpu.memory_space<vmem>>, %arg2: memref<8x128xbf16, #tpu.memory_space<vmem>>, %arg3: memref<1x128xf32, #tpu.memory_space<vmem>>, %arg4: memref<128x128xbf16, #tpu.memory_space<vmem>>, %arg5: memref<1x128xf32, #tpu.memory_space<vmem>>, %arg6: memref<128x4xbf16, #tpu.memory_space<vmem>>, %arg7: memref<1x4xf32, #tpu.memory_space<vmem>>, %arg8: memref<8x4xf32, #tpu.memory_space<vmem>>) attributes {dimension_semantics = [#tpu.dimension_semantics<parallel>], iteration_bounds = array<i64: 1>, scalar_prefetch = 0 : i64, scratch_operands = 0 : i64, tpu.core_type = #tpu.core_type<tc>, window_params = [{transform_indices = @transform_0, window_bounds = array<i64: 8, 8>}, {pipeline_mode = #tpu.pipeline_mode<synchronous>, transform_indices = @transform_1, window_bounds = array<i64: 8, 128>}, {pipeline_mode = #tpu.pipeline_mode<synchronous>, transform_indices = @transform_2, window_bounds = array<i64: 1, 128>}, {pipeline_mode = #tpu.pipeline_mode<synchronous>, transform_indices = @transform_3, window_bounds = array<i64: 128, 128>}, {pipeline_mode = #tpu.pipeline_mode<synchronous>, transform_indices = @transform_4, window_bounds = array<i64: 1, 128>}, {pipeline_mode = #tpu.pipeline_mode<synchronous>, transform_indices = @transform_5, window_bounds = array<i64: 128, 4>}, {pipeline_mode = #tpu.pipeline_mode<synchronous>, transform_indices = @transform_6, window_bounds = array<i64: 1, 4>}, {transform_indices = @transform_7, window_bounds = array<i64: 8, 4>}]} {
    %c0 = arith.constant 0 : index
    %c0_0 = arith.constant 0 : index
    %0 = vector.load %arg1[%c0, %c0_0] : memref<8x8xf32, #tpu.memory_space<vmem>>, vector<8x8xf32>
    %1 = arith.truncf %0 : vector<8x8xf32> to vector<8x8xbf16>
    %c0_1 = arith.constant 0 : index
    %c0_2 = arith.constant 0 : index
    %2 = vector.load %arg2[%c0_1, %c0_2] : memref<8x128xbf16, #tpu.memory_space<vmem>>, vector<8x128xbf16>
    %cst = arith.constant dense<0.000000e+00> : vector<8x128xf32>
    %3 = tpu.matmul %1, %2, %cst {dimension_numbers = #tpu.dot_dimension_numbers<[1], [0], [0], [1], [0, 0, 1, 1], [], []>} : vector<8x8xbf16>, vector<8x128xbf16>, vector<8x128xf32> -> vector<8x128xf32>
    %c0_3 = arith.constant 0 : index
    %c0_4 = arith.constant 0 : index
    %4 = vector.load %arg3[%c0_3, %c0_4] : memref<1x128xf32, #tpu.memory_space<vmem>>, vector<1x128xf32>
    %5 = vector.broadcast %4 : vector<1x128xf32> to vector<8x128xf32>
    %6 = arith.addf %3, %5 : vector<8x128xf32>
    %cst_5 = arith.constant 0.000000e+00 : f32
    %7 = vector.broadcast %cst_5 : f32 to vector<8x128xf32>
    %8 = arith.maximumf %6, %7 : vector<8x128xf32>
    %9 = arith.truncf %8 : vector<8x128xf32> to vector<8x128xbf16>
    %c0_6 = arith.constant 0 : index
    %c0_7 = arith.constant 0 : index
    %10 = vector.load %arg4[%c0_6, %c0_7] : memref<128x128xbf16, #tpu.memory_space<vmem>>, vector<128x128xbf16>
    %cst_8 = arith.constant dense<0.000000e+00> : vector<8x128xf32>
    %11 = tpu.matmul %9, %10, %cst_8 {dimension_numbers = #tpu.dot_dimension_numbers<[1], [0], [0], [1], [0, 0, 1, 1], [], []>} : vector<8x128xbf16>, vector<128x128xbf16>, vector<8x128xf32> -> vector<8x128xf32>
    %c0_9 = arith.constant 0 : index
    %c0_10 = arith.constant 0 : index
    %12 = vector.load %arg5[%c0_9, %c0_10] : memref<1x128xf32, #tpu.memory_space<vmem>>, vector<1x128xf32>
    %13 = vector.broadcast %12 : vector<1x128xf32> to vector<8x128xf32>
    %14 = arith.addf %11, %13 : vector<8x128xf32>
    %cst_11 = arith.constant 0.000000e+00 : f32
    %15 = vector.broadcast %cst_11 : f32 to vector<8x128xf32>
    %16 = arith.maximumf %14, %15 : vector<8x128xf32>
    %17 = arith.truncf %16 : vector<8x128xf32> to vector<8x128xbf16>
    %c0_12 = arith.constant 0 : index
    %c0_13 = arith.constant 0 : index
    %18 = vector.load %arg6[%c0_12, %c0_13] : memref<128x4xbf16, #tpu.memory_space<vmem>>, vector<128x4xbf16>
    %cst_14 = arith.constant dense<0.000000e+00> : vector<8x4xf32>
    %19 = tpu.matmul %17, %18, %cst_14 {dimension_numbers = #tpu.dot_dimension_numbers<[1], [0], [0], [1], [0, 0, 1, 1], [], []>} : vector<8x128xbf16>, vector<128x4xbf16>, vector<8x4xf32> -> vector<8x4xf32>
    %c0_15 = arith.constant 0 : index
    %c0_16 = arith.constant 0 : index
    %20 = vector.load %arg7[%c0_15, %c0_16] : memref<1x4xf32, #tpu.memory_space<vmem>>, vector<1x4xf32>
    %21 = vector.broadcast %20 : vector<1x4xf32> to vector<8x4xf32>
    %22 = arith.addf %19, %21 : vector<8x4xf32>
    %c0_17 = arith.constant 0 : index
    %c0_18 = arith.constant 0 : index
    %23 = vector.load %arg8[%c0_17, %c0_18] : memref<8x4xf32, #tpu.memory_space<vmem>>, vector<8x4xf32>
    tpu.vector_store %arg8[%c0_17, %c0_18], %22 {strides = array<i32>} : memref<8x4xf32, #tpu.memory_space<vmem>>, vector<8x4xf32>,
    return
  }
  func.func @transform_0(%arg0: i32) -> (i32, i32) {
    %c0_i32 = arith.constant 0 : i32
    %c0_i32_0 = arith.constant 0 : i32
    return %arg0, %c0_i32 : i32, i32
  }
  func.func @transform_1(%arg0: i32) -> (i32, i32) {
    %c0_i32 = arith.constant 0 : i32
    %c0_i32_0 = arith.constant 0 : i32
    %c0_i32_1 = arith.constant 0 : i32
    return %c0_i32, %c0_i32_0 : i32, i32
  }
  func.func @transform_2(%arg0: i32) -> (i32, i32) {
    %c0_i32 = arith.constant 0 : i32
    %c0_i32_0 = arith.constant 0 : i32
    %c0_i32_1 = arith.constant 0 : i32
    return %c0_i32, %c0_i32_0 : i32, i32
  }
  func.func @transform_3(%arg0: i32) -> (i32, i32) {
    %c0_i32 = arith.constant 0 : i32
    %c0_i32_0 = arith.constant 0 : i32
    %c0_i32_1 = arith.constant 0 : i32
    return %c0_i32, %c0_i32_0 : i32, i32
  }
  func.func @transform_4(%arg0: i32) -> (i32, i32) {
    %c0_i32 = arith.constant 0 : i32
    %c0_i32_0 = arith.constant 0 : i32
    %c0_i32_1 = arith.constant 0 : i32
    return %c0_i32, %c0_i32_0 : i32, i32
  }
  func.func @transform_5(%arg0: i32) -> (i32, i32) {
    %c0_i32 = arith.constant 0 : i32
    %c0_i32_0 = arith.constant 0 : i32
    %c0_i32_1 = arith.constant 0 : i32
    return %c0_i32, %c0_i32_0 : i32, i32
  }
  func.func @transform_6(%arg0: i32) -> (i32, i32) {
    %c0_i32 = arith.constant 0 : i32
    %c0_i32_0 = arith.constant 0 : i32
    %c0_i32_1 = arith.constant 0 : i32
    return %c0_i32, %c0_i32_0 : i32, i32
  }
  func.func @transform_7(%arg0: i32) -> (i32, i32) {
    %c0_i32 = arith.constant 0 : i32
    %c0_i32_0 = arith.constant 0 : i32
    return %arg0, %c0_i32 : i32, i32
  }
}

</mosaic_0001>

<llo_original>
// kernel: complex_network_forward.1
$region0: #{complex_network_forward.1}
  #allocation0 [shape = 'u32[]', space=smem, size = 0x4, offset = 0x4, fixed_abs, tag = 'smem constant byte address 0x4 - core index']
  #allocation1 [shape = 'u32[72,128]{1,0:T(1,128)}', space=vmem, size = 0x9000, scoped, tag = 'internal scratch']
  %s0 = inlined_call_operand.hbm [shape: f32[8,8], index: 0, kind: input, shape index: {}]
  %s1 = inlined_call_operand.hbm [shape: bf16[8,128], index: 1, kind: input, shape index: {}]
  %s2 = inlined_call_operand.vmem [shape: f32[1,128], index: 2, kind: input, shape index: {}]
  %s3 = inlined_call_operand.vmem [shape: bf16[128,128], index: 3, kind: input, shape index: {}]
  %s4 = inlined_call_operand.vmem [shape: f32[1,128], index: 4, kind: input, shape index: {}]
  %s5 = inlined_call_operand.vmem [shape: bf16[128,4], index: 5, kind: input, shape index: {}]
  %s6 = inlined_call_operand.vmem [shape: f32[1,4], index: 6, kind: input, shape index: {}]
  %s7 = inlined_call_operand.vmem [shape: f32[8,4], index: 7, kind: output, shape index: {}]
  %s8 = sld [smem:[#allocation0]]
  $region46: #{complex_network_forward.1} parent=0
    _
  %s10 = ssub.s32 1, %s8
  %s11 = scalar_select 0, %s10, %s8
  $region1: #{complex_network_forward.1} parent=0
    #allocation2 [shape = 'u8[4096]{0}', space=vmem, size = 0x1000, scoped, tag = 'input window, operand 0, single buffered']
    #allocation3 [shape = 's32[1]{0}', space=sflag, size = 0x4, scoped, tag = 'scoped memory for complex_network_forward.1']
    #allocation4 [shape = 'u8[2048]{0}', space=vmem, size = 0x800, scoped, tag = 'input window, operand 1, single buffered']
    #allocation5 [shape = 's32[1]{0}', space=sflag, size = 0x4, scoped, tag = 'scoped memory for complex_network_forward.1']
    %12 = vsyncpa [#allocation3], 0
    %13 = vsyncpa [#allocation5], 0
    // Predicated region
    $region2: #{complex_network_forward.1} parent=1 // pred_check
      _
    $region3: #{complex_network_forward.1} parent=1 // pred_check_branch
      %15 = sbr.rel (0) target = $region5
    $region4: #{complex_network_forward.1} parent=1 // pred_region
      %17 = vsyncadd [#allocation3], 0
      %s19 = sshll.u32 %s0, 4
      %s20 = int_to_ptr.hbm [resolvable:$true] %s19
      %s21 = sshll.u32 [#allocation2], 4
      %s22 = int_to_ptr.vmem [resolvable:$true] %s21
      %24 = dma.hbm_to_vmem [thread:$0]  %s20, 128, %s22, [#allocation3]
    $region5: #{complex_network_forward.1} parent=1 // pred_fallthru
      _
    // Predicated region
    $region6: #{complex_network_forward.1} parent=1 // pred_check
      _
    $region7: #{complex_network_forward.1} parent=1 // pred_check_branch
      %26 = sbr.rel (0) target = $region9
    $region8: #{complex_network_forward.1} parent=1 // pred_region
      %28 = vsyncadd [#allocation5], 0
      %s30 = sshll.u32 %s1, 4
      %s31 = int_to_ptr.hbm [resolvable:$true] %s30
      %s32 = sshll.u32 [#allocation4], 4
      %s33 = int_to_ptr.vmem [resolvable:$true] %s32
      %35 = dma.hbm_to_vmem [thread:$0]  %s31, 64, %s33, [#allocation5]
    $region9: #{complex_network_forward.1} parent=1 // pred_fallthru
      _
    // Predicated region
    $region10: #{complex_network_forward.1} parent=1 // pred_check
      _
    $region11: #{complex_network_forward.1} parent=1 // pred_check_branch
      %37 = sbr.rel (0) target = $region13
    $region12: #{complex_network_forward.1} parent=1 // pred_region
      _
    $region13: #{complex_network_forward.1} parent=1 // pred_fallthru
      _
    // Predicated region
    $region14: #{complex_network_forward.1} parent=1 // pred_check
      _
    $region15: #{complex_network_forward.1} parent=1 // pred_check_branch
      %39 = sbr.rel (0) target = $region17
    $region16: #{complex_network_forward.1} parent=1 // pred_region
      _
    $region17: #{complex_network_forward.1} parent=1 // pred_fallthru
      _
    // Predicated region
    $region18: #{complex_network_forward.1} parent=1 // pred_check
      _
    $region19: #{complex_network_forward.1} parent=1 // pred_check_branch
      %41 = sbr.rel (0) target = $region21
    $region20: #{complex_network_forward.1} parent=1 // pred_region
      _
    $region21: #{complex_network_forward.1} parent=1 // pred_fallthru
      _
    // Predicated region
    $region22: #{complex_network_forward.1} parent=1 // pred_check
      _
    $region23: #{complex_network_forward.1} parent=1 // pred_check_branch
      %43 = sbr.rel (0) target = $region25
    $region24: #{complex_network_forward.1} parent=1 // pred_region
      _
    $region25: #{complex_network_forward.1} parent=1 // pred_fallthru
      _
    // Predicated region
    $region26: #{complex_network_forward.1} parent=1 // pred_check
      _
    $region27: #{complex_network_forward.1} parent=1 // pred_check_branch
      %45 = sbr.rel (0) target = $region29
    $region28: #{complex_network_forward.1} parent=1 // pred_region
      _
    $region29: #{complex_network_forward.1} parent=1 // pred_fallthru
      _
    // Predicated region
    $region30: #{complex_network_forward.1} parent=1 // pred_check
      _
    $region31: #{complex_network_forward.1} parent=1 // pred_check_branch
      %47 = sbr.rel (0) target = $region33
    $region32: #{complex_network_forward.1} parent=1 // pred_region
      %49 = dma.done [#allocation3], 128
    $region33: #{complex_network_forward.1} parent=1 // pred_fallthru
      _
    // Predicated region
    $region34: #{complex_network_forward.1} parent=1 // pred_check
      _
    $region35: #{complex_network_forward.1} parent=1 // pred_check_branch
      %51 = sbr.rel (0) target = $region37
    $region36: #{complex_network_forward.1} parent=1 // pred_region
      %53 = dma.done [#allocation5], 64
    $region37: #{complex_network_forward.1} parent=1 // pred_fallthru
      _
    %v55 = vld [vmem:[#allocation2] sm:$0xff]
    %v56 = vpack.c.bf16 %v55, %v55
    %v57 = vld [vmem:[#allocation4] sm:$0xf]
    %v58 = vld [vmem:[%s2] sm:$0x1]
    %v60 = vperm.slane %v58, 0
    %vm62 = vcmask 64512
    %v64 = vsel %vm62, %v56, 0
    %vm66 = vcmask 1043456
    %v68 = vsel %vm66, %v57, 0
    %70 = vmatpush.bf16.msra.mxu0 0
    %71 = vmatpush.bf16.msra.mxu0 0
    %72 = vmatpush.bf16.msra.mxu0 0
    %73 = vmatpush.bf16.msra.mxu0 0
    %74 = vmatpush.bf16.msra.mxu0 0
    %75 = vmatpush.bf16.msra.mxu0 0
    %76 = vmatpush.bf16.msra.mxu0 0
    %77 = vmatpush.bf16.msra.mxu0 %v68
    %78 = vmatmul.bf16.gmra.mxu0 %v64
    %v79 = vpop.f32.mrf.mxu0
    %v80 = vadd.f32 %v60, %v79
    %v81 = vpop.f32.mrf.mxu0
    %82 = vdwg.mxu0
    %v83 = vmax.f32 %v80, 0.0
    %v84 = vpack.c.bf16 %v83, %v83
    %v85 = vld [vmem:[%s3] sm:$0xf]
    %v86 = vld [vmem:[%s3 + $0x4] sm:$0xf]
    %v87 = vld [vmem:[%s3 + $0x8] sm:$0xf]
    %v88 = vld [vmem:[%s3 + $0xc] sm:$0xf]
    %v89 = vld [vmem:[%s3 + $0x10] sm:$0xf]
    %v90 = vld [vmem:[%s3 + $0x14] sm:$0xf]
    %v91 = vld [vmem:[%s3 + $0x18] sm:$0xf]
    %v92 = vld [vmem:[%s3 + $0x1c] sm:$0xf]
    %v93 = vld [vmem:[%s3 + $0x20] sm:$0xf]
    %v94 = vld [vmem:[%s3 + $0x24] sm:$0xf]
    %v95 = vld [vmem:[%s3 + $0x28] sm:$0xf]
    %v96 = vld [vmem:[%s3 + $0x2c] sm:$0xf]
    %v97 = vld [vmem:[%s3 + $0x30] sm:$0xf]
    %v98 = vld [vmem:[%s3 + $0x34] sm:$0xf]
    %v99 = vld [vmem:[%s3 + $0x38] sm:$0xf]
    %v100 = vld [vmem:[%s3 + $0x3c] sm:$0xf]
    %v101 = vld [vmem:[%s4] sm:$0x1]
    %v103 = vperm.slane %v101, 0
    %v121 = vunpack.c.l.b16 %v85
    %v122 = vunpack.c.l.b16 %v86
    %v123 = vunpack.c.l.b16 %v87
    %v124 = vunpack.c.l.b16 %v88
    %v125 = vunpack.c.l.b16 %v89
    %v126 = vunpack.c.l.b16 %v90
    %v127 = vunpack.c.l.b16 %v91
    %v128 = vunpack.c.l.b16 %v92
    %v129 = vunpack.c.l.b16 %v93
    %v130 = vunpack.c.l.b16 %v94
    %v131 = vunpack.c.l.b16 %v95
    %v132 = vunpack.c.l.b16 %v96
    %v133 = vunpack.c.l.b16 %v97
    %v134 = vunpack.c.l.b16 %v98
    %v135 = vunpack.c.l.b16 %v99
    %v136 = vunpack.c.l.b16 %v100
    %v137 = vpack.c.b16 %v122, %v121
    %v138 = vpack.c.b16 %v124, %v123
    %v139 = vpack.c.b16 %v126, %v125
    %v140 = vpack.c.b16 %v128, %v127
    %v141 = vpack.c.b16 %v130, %v129
    %v142 = vpack.c.b16 %v132, %v131
    %v143 = vpack.c.b16 %v134, %v133
    %v144 = vpack.c.b16 %v136, %v135
    %153 = vmatpush.bf16.msra.mxu0 %v144
    %154 = vmatpush.bf16.msra.mxu0 %v143
    %155 = vmatpush.bf16.msra.mxu0 %v142
    %156 = vmatpush.bf16.msra.mxu0 %v141
    %157 = vmatpush.bf16.msra.mxu0 %v140
    %158 = vmatpush.bf16.msra.mxu0 %v139
    %159 = vmatpush.bf16.msra.mxu0 %v138
    %160 = vmatpush.bf16.msra.mxu0 %v137
    %161 = vmatmul.bf16.gmra.mxu0 %v84
    %v162 = vpop.f32.mrf.mxu0
    %v163 = vadd.f32 %v103, %v162
    %v164 = vpop.f32.mrf.mxu0
    %165 = vdwg.mxu0
    %v166 = vmax.f32 %v163, 0.0
    %v167 = vpack.c.bf16 %v166, %v166
    %v168 = vld [vmem:[%s5] sm:$0xf]
    %v169 = vld [vmem:[%s5 + $0x4] sm:$0xf]
    %v170 = vld [vmem:[%s5 + $0x8] sm:$0xf]
    %v171 = vld [vmem:[%s5 + $0xc] sm:$0xf]
    %v172 = vld [vmem:[%s5 + $0x10] sm:$0xf]
    %v173 = vld [vmem:[%s5 + $0x14] sm:$0xf]
    %v174 = vld [vmem:[%s5 + $0x18] sm:$0xf]
    %v175 = vld [vmem:[%s5 + $0x1c] sm:$0xf]
    %v176 = vld [vmem:[%s5 + $0x20] sm:$0xf]
    %v177 = vld [vmem:[%s5 + $0x24] sm:$0xf]
    %v178 = vld [vmem:[%s5 + $0x28] sm:$0xf]
    %v179 = vld [vmem:[%s5 + $0x2c] sm:$0xf]
    %v180 = vld [vmem:[%s5 + $0x30] sm:$0xf]
    %v181 = vld [vmem:[%s5 + $0x34] sm:$0xf]
    %v182 = vld [vmem:[%s5 + $0x38] sm:$0xf]
    %v183 = vld [vmem:[%s5 + $0x3c] sm:$0xf]
    %v184 = vld [vmem:[%s6] sm:$0x1]
    %v186 = vperm.slane %v184, 0
    %v204 = vunpack.c.l.b16 %v168
    %v205 = vunpack.c.l.b16 %v169
    %v206 = vunpack.c.l.b16 %v170
    %v207 = vunpack.c.l.b16 %v171
    %v208 = vunpack.c.l.b16 %v172
    %v209 = vunpack.c.l.b16 %v173
    %v210 = vunpack.c.l.b16 %v174
    %v211 = vunpack.c.l.b16 %v175
    %v212 = vunpack.c.l.b16 %v176
    %v213 = vunpack.c.l.b16 %v177
    %v214 = vunpack.c.l.b16 %v178
    %v215 = vunpack.c.l.b16 %v179
    %v216 = vunpack.c.l.b16 %v180
    %v217 = vunpack.c.l.b16 %v181
    %v218 = vunpack.c.l.b16 %v182
    %v219 = vunpack.c.l.b16 %v183
    %v220 = vpack.c.b16 %v205, %v204
    %v221 = vpack.c.b16 %v207, %v206
    %v222 = vpack.c.b16 %v209, %v208
    %v223 = vpack.c.b16 %v211, %v210
    %v224 = vpack.c.b16 %v213, %v212
    %v225 = vpack.c.b16 %v215, %v214
    %v226 = vpack.c.b16 %v217, %v216
    %v227 = vpack.c.b16 %v219, %v218
    %236 = vmatpush.bf16.msra.mxu0 %v227
    %237 = vmatpush.bf16.msra.mxu0 %v226
    %238 = vmatpush.bf16.msra.mxu0 %v225
    %239 = vmatpush.bf16.msra.mxu0 %v224
    %240 = vmatpush.bf16.msra.mxu0 %v223
    %241 = vmatpush.bf16.msra.mxu0 %v222
    %242 = vmatpush.bf16.msra.mxu0 %v221
    %243 = vmatpush.bf16.msra.mxu0 %v220
    %244 = vmatmul.bf16.gmra.mxu0 %v167
    %v245 = vpop.f32.mrf.mxu0
    %v246 = vadd.f32 %v186, %v245
    %v247 = vpop.f32.mrf.mxu0
    %248 = vdwg.mxu0
    %vm249 = vcmask 31744
    %250 = vst.msk [vmem:[%s7] sm:$0xff] %vm249, %v246
    // Predicated region
    $region38: #{complex_network_forward.1} parent=1 // pred_check
      _
    $region39: #{complex_network_forward.1} parent=1 // pred_check_branch
      %252 = sbr.rel (0) target = $region41
    $region40: #{complex_network_forward.1} parent=1 // pred_region
      _
    $region41: #{complex_network_forward.1} parent=1 // pred_fallthru
      _
    // Predicated region
    $region42: #{complex_network_forward.1} parent=1 // pred_check
      _
    $region43: #{complex_network_forward.1} parent=1 // pred_check_branch
      %254 = sbr.rel (0) target = $region45
    $region44: #{complex_network_forward.1} parent=1 // pred_region
      _
    $region45: #{complex_network_forward.1} parent=1 // pred_fallthru
      _
    %255 = vsyncpa [#allocation3], 1
    %256 = vsyncpa [#allocation5], 1

</llo_original>
